<compile_context>
chip_gen: v6e
topology: v6e:2x2x1
jax: 0.10.0
libtpu: 0.0.40
codegen_flags: <defaults>
</compile_context>

<pallas_src>
import jax
import jax.numpy as jnp
from jax import lax
from jax.experimental import pallas as pl
from jax.experimental.pallas import tpu as pltpu


def lstm_clf_kernel(g0init_ref, addvec_ref, wf_ref, wfc_ref, bfc_ref,
                    logits_ref, state_ref):
    """2-layer LSTM recurrence (software-pipelined across layers) + final FC.

    g0init_ref : (B, 4H) f32  -- layer-0 gate pre-activation at t=0 (x0@Wih0+b0), order [i,f,o,g]
    addvec_ref : (T, B, 8H) f32 -- per-step additive slab, columns [i0 i1 f0 f1 o0 o1 g0 g1];
                                   layer-0 columns hold xp[t+1], layer-1 columns hold b1.
    wf_ref     : (2H, 8H) f32 -- fused recurrent weights (rows 0:H <- h0, rows H:2H <- h1)
    wfc_ref    : (H, 128) f32 -- FC weight zero-padded to 128 output lanes
    bfc_ref    : (1, 128) f32
    logits_ref : (B, 128) f32
    state_ref  : (B, 4H) f32  -- packed [h0 | h1 | c0 | c1]
    """
    T, B, _ = addvec_ref.shape
    H = wf_ref.shape[0] // 2
    wf = wf_ref[...]                                    # hoisted: loaded once

    # ---- Prologue: layer-0 cell at step 0 (h0_init = c0_init = 0). ----
    g0 = g0init_ref[...]                                # (B, 4H), order [i, f, o, g]
    s0 = jax.nn.sigmoid(g0[:, :3 * H])
    c0 = s0[:, 0:H] * jnp.tanh(g0[:, 3 * H:])           # f*0 + i*tanh(g)
    h0 = s0[:, 2 * H:3 * H] * jnp.tanh(c0)
    zeros = jnp.zeros((B, H), jnp.float32)
    hh = jnp.concatenate([h0, zeros], axis=1)           # [h0(0) | h1(-1)=0]
    cc = jnp.concatenate([c0, zeros], axis=1)           # [c0(0) | c1(-1)=0]

    def fused_step(k, hh, cc):
        # Single MXU push: [h0(k) | h1(k-1)] @ W_fused  -> [g0(k+1)-rec | g1(k)] (B, 8H).
        slab = (jnp.dot(hh, wf, preferred_element_type=jnp.float32)
                + addvec_ref[k])
        sig = jax.nn.sigmoid(slab[:, :6 * H])           # [i0 i1 f0 f1 o0 o1], one EUP pass
        i_pk = sig[:, 0:2 * H]
        f_pk = sig[:, 2 * H:4 * H]
        o_pk = sig[:, 4 * H:6 * H]
        g_pk = jnp.tanh(slab[:, 6 * H:])                # [g0 g1], one EUP pass
        cc_new = f_pk * cc + i_pk * g_pk                # packed [c0(k+1) | c1(k)]
        hh_new = o_pk * jnp.tanh(cc_new)                # packed [h0(k+1) | h1(k)]
        return hh_new, cc_new

    def body(k, carry):
        hh, cc = carry
        return fused_step(k, hh, cc)

    # Fully unrolled: lets the scheduler overlap layer-1(t) math with the MXU push of t+1.
    hh, cc = lax.fori_loop(0, T - 1, body, (hh, cc), unroll=True)
    # hh = [h0(T-1) | h1(T-2)], cc = [c0(T-1) | c1(T-2)]
    h0_fin = hh[:, :H]
    c0_fin = cc[:, :H]

    # ---- Epilogue: last layer-1 update; the layer-0 half of the slab is discarded. ----
    hh2, cc2 = fused_step(T - 1, hh, cc)
    h1_fin = hh2[:, H:]
    c1_fin = cc2[:, H:]

    # fc(rnn_out[:, -1, :]) == fc(h1 at final step); 128-lane padded -> unmasked store.
    logits_ref[...] = (jnp.dot(h1_fin, wfc_ref[...],
                               preferred_element_type=jnp.float32)
                       + bfc_ref[...])
    # Lane-dense packed state store: one (8,128) unmasked vst.
    state_ref[...] = jnp.concatenate([h0_fin, h1_fin, c0_fin, c1_fin], axis=1)


def rnn_classifier_forward(x_btf, params):
    """x_btf: (B, T, n_in) batch_first, like the PyTorch module. Returns (logits, (h_n, c_n))."""
    B, T, n_in = x_btf.shape
    H = params["whh0"].shape[0]
    n_out = params["wfc"].shape[1]
    NPAD = 128  # lane-dense logits output width

    def split4(a):  # split last axis into PyTorch-order [i, f, g, o] chunks of width H
        return a[..., 0:H], a[..., H:2 * H], a[..., 2 * H:3 * H], a[..., 3 * H:4 * H]

    # --- Layer-0 input projection for ALL timesteps: one big matmul, time-major ---
    xp = (jnp.einsum("btf,fg->tbg", x_btf, params["wih0"],
                     precision=lax.Precision.HIGHEST)
          + params["b0"]).astype(jnp.float32)            # (T, B, 4H), order [i, f, g, o]
    i0x, f0x, g0x, o0x = split4(xp)

    # Prologue gate pre-activation (step 0), reordered to [i, f, o, g].
    g0init = jnp.concatenate([i0x[0], f0x[0], o0x[0], g0x[0]], axis=-1)   # (B, 4H)

    # Per-step additive slab, columns [i0 i1 f0 f1 o0 o1 g0 g1]:
    #   layer-0 columns <- xp[k+1] (zeros for the final epilogue step), layer-1 columns <- b1.
    zrow = jnp.zeros((1, B, H), jnp.float32)
    shift = lambda a: jnp.concatenate([a[1:], zrow], axis=0)              # a[k+1], zero-padded
    i1b, f1b, g1b, o1b = split4(jnp.broadcast_to(params["b1"], (B, 4 * H)))
    bcast = lambda a: jnp.broadcast_to(a, (T, B, H))
    addvec = jnp.concatenate(
        [shift(i0x), bcast(i1b), shift(f0x), bcast(f1b),
         shift(o0x), bcast(o1b), shift(g0x), bcast(g1b)], axis=-1)        # (T, B, 8H)

    # Fused recurrent weight (2H, 8H): rows 0:H multiply h0, rows H:2H multiply h1.
    i0w, f0w, g0w, o0w = split4(params["whh0"])
    i1a, f1a, g1a, o1a = split4(params["wih1"])
    i1c, f1c, g1c, o1c = split4(params["whh1"])
    zhh = jnp.zeros((H, H), jnp.float32)
    wf = jnp.concatenate([
        jnp.concatenate([i0w, i1a, f0w, f1a, o0w, o1a, g0w, g1a], axis=1),
        jnp.concatenate([zhh, i1c, zhh, f1c, zhh, o1c, zhh, g1c], axis=1),
    ], axis=0)                                                            # (2H, 8H)

    wfc_pad = jnp.zeros((H, NPAD), jnp.float32).at[:, :n_out].set(params["wfc"])
    bfc_pad = jnp.zeros((1, NPAD), jnp.float32).at[:, :n_out].set(params["bfc"])

    vmem = pl.BlockSpec(memory_space=pltpu.MemorySpace.VMEM)
    logits_pad, state = pl.pallas_call(
        lstm_clf_kernel,
        out_shape=(
            jax.ShapeDtypeStruct((B, NPAD), jnp.float32),
            jax.ShapeDtypeStruct((B, 4 * H), jnp.float32),
        ),
        in_specs=[vmem] * 5,
        out_specs=(vmem, vmem),
    )(g0init, addvec, wf, wfc_pad, bfc_pad)

    logits = logits_pad[:, :n_out]
    h_n = jnp.stack([state[:, 0:H], state[:, H:2 * H]])
    c_n = jnp.stack([state[:, 2 * H:3 * H], state[:, 3 * H:4 * H]])
    return logits, (h_n, c_n)


def init_params(key, n_in, n_out, cell_size):
    """Deterministic PyTorch-style uniform(-1/sqrt(H), 1/sqrt(H)) init (standard [i,f,g,o] layout)."""
    H = cell_size
    k = 1.0 / jnp.sqrt(jnp.float32(H))
    keys = jax.random.split(key, 12)
    u = lambda kk, shape: jax.random.uniform(kk, shape, jnp.float32, -k, k)
    # Layer 0
    w_ih0 = u(keys[0], (4 * H, n_in))
    w_hh0 = u(keys[1], (4 * H, H))
    b_ih0 = u(keys[2], (4 * H,))
    b_hh0 = u(keys[3], (4 * H,))
    # Layer 1
    w_ih1 = u(keys[4], (4 * H, H))
    w_hh1 = u(keys[5], (4 * H, H))
    b_ih1 = u(keys[6], (4 * H,))
    b_hh1 = u(keys[7], (4 * H,))
    # FC
    kf = 1.0 / jnp.sqrt(jnp.float32(H))
    w_fc = jax.random.uniform(keys[8], (n_out, H), jnp.float32, -kf, kf)
    b_fc = jax.random.uniform(keys[9], (n_out,), jnp.float32, -kf, kf)
    return {
        "wih0": w_ih0.T, "whh0": w_hh0.T, "b0": (b_ih0 + b_hh0)[None, :],
        "wih1": w_ih1.T, "whh1": w_hh1.T, "b1": (b_ih1 + b_hh1)[None, :],
        "wfc": w_fc.T, "bfc": b_fc[None, :],
    }


def reference_forward(x_btf, params):
    """Pure-JAX f32 reference (same math, standard gate order) to validate the kernel."""
    H = params["whh0"].shape[0]
    hp = lax.Precision.HIGHEST

    def cell(x_in, h, c, wih, whh, b):
        g = (jnp.dot(x_in, wih, precision=hp) + jnp.dot(h, whh, precision=hp) + b)
        i = jax.nn.sigmoid(g[:, 0 * H:1 * H])
        f = jax.nn.sigmoid(g[:, 1 * H:2 * H])
        gg = jnp.tanh(g[:, 2 * H:3 * H])
        o = jax.nn.sigmoid(g[:, 3 * H:4 * H])
        c = f * c + i * gg
        return o * jnp.tanh(c), c

    B = x_btf.shape[0]
    h0 = c0 = h1 = c1 = jnp.zeros((B, H), jnp.float32)
    for t in range(x_btf.shape[1]):
        h0, c0 = cell(x_btf[:, t, :], h0, c0, params["wih0"], params["whh0"], params["b0"])
        h1, c1 = cell(h0, h1, c1, params["wih1"], params["whh1"], params["b1"])
    logits = jnp.dot(h1, params["wfc"], precision=hp) + params["bfc"]
    return logits, (jnp.stack([h0, h1]), jnp.stack([c0, c1]))


if __name__ == "__main__":
    # Small shapes implied by the module: batch_first (B, T, n_in) input.
    B, T, n_in, cell_size, n_out = 8, 8, 16, 32, 4

    key = jax.random.PRNGKey(0)
    kx, kp = jax.random.split(key)
    x = jax.random.normal(kx, (B, T, n_in), jnp.float32)
    params = init_params(kp, n_in, n_out, cell_size)

    logits, (h_n, c_n) = jax.jit(rnn_classifier_forward)(x, params)
    jax.block_until_ready((logits, h_n, c_n))

    ref_logits, (ref_h, ref_c) = reference_forward(x, params)
    # Full-f32 kernel path -> tight tolerance vs f32 reference.
    assert jnp.allclose(logits, ref_logits, atol=2e-3, rtol=2e-3)
    assert jnp.allclose(h_n, ref_h, atol=2e-3, rtol=2e-3)
    assert jnp.allclose(c_n, ref_c, atol=2e-3, rtol=2e-3)
    assert logits.shape == (B, n_out) and h_n.shape == (2, B, cell_size)

    print("KERNEL_OK")
</pallas_src>

<mosaic_0001>
module attributes {stable_mosaic.version = 11 : i64} {
  func.func @lstm_clf_kernel(%arg0: memref<8x128xf32, #tpu.memory_space<vmem>>, %arg1: memref<8x8x256xf32, #tpu.memory_space<vmem>>, %arg2: memref<64x256xf32, #tpu.memory_space<vmem>>, %arg3: memref<32x128xf32, #tpu.memory_space<vmem>>, %arg4: memref<1x128xf32, #tpu.memory_space<vmem>>, %arg5: memref<8x128xf32, #tpu.memory_space<vmem>>, %arg6: memref<8x128xf32, #tpu.memory_space<vmem>>) attributes {dimension_semantics = [], scalar_prefetch = 0 : i64, scratch_operands = 0 : i64, tpu.core_type = #tpu.core_type<tc>} {
    %c0 = arith.constant 0 : index
    %c0_0 = arith.constant 0 : index
    %0 = vector.load %arg2[%c0, %c0_0] : memref<64x256xf32, #tpu.memory_space<vmem>>, vector<64x256xf32>
    %c0_1 = arith.constant 0 : index
    %c0_2 = arith.constant 0 : index
    %1 = vector.load %arg0[%c0_1, %c0_2] : memref<8x128xf32, #tpu.memory_space<vmem>>, vector<8x128xf32>
    %2 = vector.extract_strided_slice %1 {offsets = [0, 0], sizes = [8, 96], strides = [1, 1]} : vector<8x128xf32> to vector<8x96xf32>
    %3 = arith.negf %2 : vector<8x96xf32>
    %4 = math.exp %3 : vector<8x96xf32>
    %cst = arith.constant 1.000000e+00 : f32
    %5 = vector.broadcast %cst : f32 to vector<8x96xf32>
    %6 = arith.addf %5, %4 : vector<8x96xf32>
    %7 = arith.divf %5, %6 : vector<8x96xf32>
    %8 = vector.extract_strided_slice %7 {offsets = [0, 0], sizes = [8, 32], strides = [1, 1]} : vector<8x96xf32> to vector<8x32xf32>
    %9 = vector.extract_strided_slice %1 {offsets = [0, 96], sizes = [8, 32], strides = [1, 1]} : vector<8x128xf32> to vector<8x32xf32>
    %10 = math.tanh %9 : vector<8x32xf32>
    %11 = arith.mulf %8, %10 : vector<8x32xf32>
    %12 = vector.extract_strided_slice %7 {offsets = [0, 64], sizes = [8, 32], strides = [1, 1]} : vector<8x96xf32> to vector<8x32xf32>
    %13 = math.tanh %11 : vector<8x32xf32>
    %14 = arith.mulf %12, %13 : vector<8x32xf32>
    %cst_3 = arith.constant 0.000000e+00 : f32
    %15 = vector.broadcast %cst_3 : f32 to vector<8x32xf32>
    %16 = tpu.concatenate %14, %15 in 1 : vector<8x32xf32>, vector<8x32xf32> -> vector<8x64xf32>
    %17 = tpu.concatenate %11, %15 in 1 : vector<8x32xf32>, vector<8x32xf32> -> vector<8x64xf32>
    %c0_i32 = arith.constant 0 : i32
    %cst_4 = arith.constant dense<0.000000e+00> : vector<8x256xf32>
    %18 = tpu.matmul %16, %0, %cst_4 {dimension_numbers = #tpu.dot_dimension_numbers<[1], [0], [0], [1], [0, 0, 1, 1], [], []>} : vector<8x64xf32>, vector<64x256xf32>, vector<8x256xf32> -> vector<8x256xf32>
    %19 = arith.index_cast %c0_i32 : i32 to index
    %c0_5 = arith.constant 0 : index
    %c0_6 = arith.constant 0 : index
    %20 = vector.load %arg1[%19, %c0_5, %c0_6] : memref<8x8x256xf32, #tpu.memory_space<vmem>>, vector<1x8x256xf32>
    %21 = vector.shape_cast %20 : vector<1x8x256xf32> to vector<8x256xf32>
    %22 = arith.addf %18, %21 : vector<8x256xf32>
    %23 = vector.extract_strided_slice %22 {offsets = [0, 0], sizes = [8, 192], strides = [1, 1]} : vector<8x256xf32> to vector<8x192xf32>
    %24 = arith.negf %23 : vector<8x192xf32>
    %25 = math.exp %24 : vector<8x192xf32>
    %cst_7 = arith.constant 1.000000e+00 : f32
    %26 = vector.broadcast %cst_7 : f32 to vector<8x192xf32>
    %27 = arith.addf %26, %25 : vector<8x192xf32>
    %28 = arith.divf %26, %27 : vector<8x192xf32>
    %29 = vector.extract_strided_slice %28 {offsets = [0, 0], sizes = [8, 64], strides = [1, 1]} : vector<8x192xf32> to vector<8x64xf32>
    %30 = vector.extract_strided_slice %28 {offsets = [0, 64], sizes = [8, 64], strides = [1, 1]} : vector<8x192xf32> to vector<8x64xf32>
    %31 = vector.extract_strided_slice %28 {offsets = [0, 128], sizes = [8, 64], strides = [1, 1]} : vector<8x192xf32> to vector<8x64xf32>
    %32 = vector.extract_strided_slice %22 {offsets = [0, 192], sizes = [8, 64], strides = [1, 1]} : vector<8x256xf32> to vector<8x64xf32>
    %33 = math.tanh %32 : vector<8x64xf32>
    %34 = arith.mulf %30, %17 : vector<8x64xf32>
    %35 = arith.mulf %29, %33 : vector<8x64xf32>
    %36 = arith.addf %34, %35 : vector<8x64xf32>
    %37 = math.tanh %36 : vector<8x64xf32>
    %38 = arith.mulf %31, %37 : vector<8x64xf32>
    %c1_i32 = arith.constant 1 : i32
    %cst_8 = arith.constant dense<0.000000e+00> : vector<8x256xf32>
    %39 = tpu.matmul %38, %0, %cst_8 {dimension_numbers = #tpu.dot_dimension_numbers<[1], [0], [0], [1], [0, 0, 1, 1], [], []>} : vector<8x64xf32>, vector<64x256xf32>, vector<8x256xf32> -> vector<8x256xf32>
    %40 = arith.index_cast %c1_i32 : i32 to index
    %c0_9 = arith.constant 0 : index
    %c0_10 = arith.constant 0 : index
    %41 = vector.load %arg1[%40, %c0_9, %c0_10] : memref<8x8x256xf32, #tpu.memory_space<vmem>>, vector<1x8x256xf32>
    %42 = vector.shape_cast %41 : vector<1x8x256xf32> to vector<8x256xf32>
    %43 = arith.addf %39, %42 : vector<8x256xf32>
    %44 = vector.extract_strided_slice %43 {offsets = [0, 0], sizes = [8, 192], strides = [1, 1]} : vector<8x256xf32> to vector<8x192xf32>
    %45 = arith.negf %44 : vector<8x192xf32>
    %46 = math.exp %45 : vector<8x192xf32>
    %cst_11 = arith.constant 1.000000e+00 : f32
    %47 = vector.broadcast %cst_11 : f32 to vector<8x192xf32>
    %48 = arith.addf %47, %46 : vector<8x192xf32>
    %49 = arith.divf %47, %48 : vector<8x192xf32>
    %50 = vector.extract_strided_slice %49 {offsets = [0, 0], sizes = [8, 64], strides = [1, 1]} : vector<8x192xf32> to vector<8x64xf32>
    %51 = vector.extract_strided_slice %49 {offsets = [0, 64], sizes = [8, 64], strides = [1, 1]} : vector<8x192xf32> to vector<8x64xf32>
    %52 = vector.extract_strided_slice %49 {offsets = [0, 128], sizes = [8, 64], strides = [1, 1]} : vector<8x192xf32> to vector<8x64xf32>
    %53 = vector.extract_strided_slice %43 {offsets = [0, 192], sizes = [8, 64], strides = [1, 1]} : vector<8x256xf32> to vector<8x64xf32>
    %54 = math.tanh %53 : vector<8x64xf32>
    %55 = arith.mulf %51, %36 : vector<8x64xf32>
    %56 = arith.mulf %50, %54 : vector<8x64xf32>
    %57 = arith.addf %55, %56 : vector<8x64xf32>
    %58 = math.tanh %57 : vector<8x64xf32>
    %59 = arith.mulf %52, %58 : vector<8x64xf32>
    %c2_i32 = arith.constant 2 : i32
    %cst_12 = arith.constant dense<0.000000e+00> : vector<8x256xf32>
    %60 = tpu.matmul %59, %0, %cst_12 {dimension_numbers = #tpu.dot_dimension_numbers<[1], [0], [0], [1], [0, 0, 1, 1], [], []>} : vector<8x64xf32>, vector<64x256xf32>, vector<8x256xf32> -> vector<8x256xf32>
    %61 = arith.index_cast %c2_i32 : i32 to index
    %c0_13 = arith.constant 0 : index
    %c0_14 = arith.constant 0 : index
    %62 = vector.load %arg1[%61, %c0_13, %c0_14] : memref<8x8x256xf32, #tpu.memory_space<vmem>>, vector<1x8x256xf32>
    %63 = vector.shape_cast %62 : vector<1x8x256xf32> to vector<8x256xf32>
    %64 = arith.addf %60, %63 : vector<8x256xf32>
    %65 = vector.extract_strided_slice %64 {offsets = [0, 0], sizes = [8, 192], strides = [1, 1]} : vector<8x256xf32> to vector<8x192xf32>
    %66 = arith.negf %65 : vector<8x192xf32>
    %67 = math.exp %66 : vector<8x192xf32>
    %cst_15 = arith.constant 1.000000e+00 : f32
    %68 = vector.broadcast %cst_15 : f32 to vector<8x192xf32>
    %69 = arith.addf %68, %67 : vector<8x192xf32>
    %70 = arith.divf %68, %69 : vector<8x192xf32>
    %71 = vector.extract_strided_slice %70 {offsets = [0, 0], sizes = [8, 64], strides = [1, 1]} : vector<8x192xf32> to vector<8x64xf32>
    %72 = vector.extract_strided_slice %70 {offsets = [0, 64], sizes = [8, 64], strides = [1, 1]} : vector<8x192xf32> to vector<8x64xf32>
    %73 = vector.extract_strided_slice %70 {offsets = [0, 128], sizes = [8, 64], strides = [1, 1]} : vector<8x192xf32> to vector<8x64xf32>
    %74 = vector.extract_strided_slice %64 {offsets = [0, 192], sizes = [8, 64], strides = [1, 1]} : vector<8x256xf32> to vector<8x64xf32>
    %75 = math.tanh %74 : vector<8x64xf32>
    %76 = arith.mulf %72, %57 : vector<8x64xf32>
    %77 = arith.mulf %71, %75 : vector<8x64xf32>
    %78 = arith.addf %76, %77 : vector<8x64xf32>
    %79 = math.tanh %78 : vector<8x64xf32>
    %80 = arith.mulf %73, %79 : vector<8x64xf32>
    %c3_i32 = arith.constant 3 : i32
    %cst_16 = arith.constant dense<0.000000e+00> : vector<8x256xf32>
    %81 = tpu.matmul %80, %0, %cst_16 {dimension_numbers = #tpu.dot_dimension_numbers<[1], [0], [0], [1], [0, 0, 1, 1], [], []>} : vector<8x64xf32>, vector<64x256xf32>, vector<8x256xf32> -> vector<8x256xf32>
    %82 = arith.index_cast %c3_i32 : i32 to index
    %c0_17 = arith.constant 0 : index
    %c0_18 = arith.constant 0 : index
    %83 = vector.load %arg1[%82, %c0_17, %c0_18] : memref<8x8x256xf32, #tpu.memory_space<vmem>>, vector<1x8x256xf32>
    %84 = vector.shape_cast %83 : vector<1x8x256xf32> to vector<8x256xf32>
    %85 = arith.addf %81, %84 : vector<8x256xf32>
    %86 = vector.extract_strided_slice %85 {offsets = [0, 0], sizes = [8, 192], strides = [1, 1]} : vector<8x256xf32> to vector<8x192xf32>
    %87 = arith.negf %86 : vector<8x192xf32>
    %88 = math.exp %87 : vector<8x192xf32>
    %cst_19 = arith.constant 1.000000e+00 : f32
    %89 = vector.broadcast %cst_19 : f32 to vector<8x192xf32>
    %90 = arith.addf %89, %88 : vector<8x192xf32>
    %91 = arith.divf %89, %90 : vector<8x192xf32>
    %92 = vector.extract_strided_slice %91 {offsets = [0, 0], sizes = [8, 64], strides = [1, 1]} : vector<8x192xf32> to vector<8x64xf32>
    %93 = vector.extract_strided_slice %91 {offsets = [0, 64], sizes = [8, 64], strides = [1, 1]} : vector<8x192xf32> to vector<8x64xf32>
    %94 = vector.extract_strided_slice %91 {offsets = [0, 128], sizes = [8, 64], strides = [1, 1]} : vector<8x192xf32> to vector<8x64xf32>
    %95 = vector.extract_strided_slice %85 {offsets = [0, 192], sizes = [8, 64], strides = [1, 1]} : vector<8x256xf32> to vector<8x64xf32>
    %96 = math.tanh %95 : vector<8x64xf32>
    %97 = arith.mulf %93, %78 : vector<8x64xf32>
    %98 = arith.mulf %92, %96 : vector<8x64xf32>
    %99 = arith.addf %97, %98 : vector<8x64xf32>
    %100 = math.tanh %99 : vector<8x64xf32>
    %101 = arith.mulf %94, %100 : vector<8x64xf32>
    %c4_i32 = arith.constant 4 : i32
    %cst_20 = arith.constant dense<0.000000e+00> : vector<8x256xf32>
    %102 = tpu.matmul %101, %0, %cst_20 {dimension_numbers = #tpu.dot_dimension_numbers<[1], [0], [0], [1], [0, 0, 1, 1], [], []>} : vector<8x64xf32>, vector<64x256xf32>, vector<8x256xf32> -> vector<8x256xf32>
    %103 = arith.index_cast %c4_i32 : i32 to index
    %c0_21 = arith.constant 0 : index
    %c0_22 = arith.constant 0 : index
    %104 = vector.load %arg1[%103, %c0_21, %c0_22] : memref<8x8x256xf32, #tpu.memory_space<vmem>>, vector<1x8x256xf32>
    %105 = vector.shape_cast %104 : vector<1x8x256xf32> to vector<8x256xf32>
    %106 = arith.addf %102, %105 : vector<8x256xf32>
    %107 = vector.extract_strided_slice %106 {offsets = [0, 0], sizes = [8, 192], strides = [1, 1]} : vector<8x256xf32> to vector<8x192xf32>
    %108 = arith.negf %107 : vector<8x192xf32>
    %109 = math.exp %108 : vector<8x192xf32>
    %cst_23 = arith.constant 1.000000e+00 : f32
    %110 = vector.broadcast %cst_23 : f32 to vector<8x192xf32>
    %111 = arith.addf %110, %109 : vector<8x192xf32>
    %112 = arith.divf %110, %111 : vector<8x192xf32>
    %113 = vector.extract_strided_slice %112 {offsets = [0, 0], sizes = [8, 64], strides = [1, 1]} : vector<8x192xf32> to vector<8x64xf32>
    %114 = vector.extract_strided_slice %112 {offsets = [0, 64], sizes = [8, 64], strides = [1, 1]} : vector<8x192xf32> to vector<8x64xf32>
    %115 = vector.extract_strided_slice %112 {offsets = [0, 128], sizes = [8, 64], strides = [1, 1]} : vector<8x192xf32> to vector<8x64xf32>
    %116 = vector.extract_strided_slice %106 {offsets = [0, 192], sizes = [8, 64], strides = [1, 1]} : vector<8x256xf32> to vector<8x64xf32>
    %117 = math.tanh %116 : vector<8x64xf32>
    %118 = arith.mulf %114, %99 : vector<8x64xf32>
    %119 = arith.mulf %113, %117 : vector<8x64xf32>
    %120 = arith.addf %118, %119 : vector<8x64xf32>
    %121 = math.tanh %120 : vector<8x64xf32>
    %122 = arith.mulf %115, %121 : vector<8x64xf32>
    %c5_i32 = arith.constant 5 : i32
    %cst_24 = arith.constant dense<0.000000e+00> : vector<8x256xf32>
    %123 = tpu.matmul %122, %0, %cst_24 {dimension_numbers = #tpu.dot_dimension_numbers<[1], [0], [0], [1], [0, 0, 1, 1], [], []>} : vector<8x64xf32>, vector<64x256xf32>, vector<8x256xf32> -> vector<8x256xf32>
    %124 = arith.index_cast %c5_i32 : i32 to index
    %c0_25 = arith.constant 0 : index
    %c0_26 = arith.constant 0 : index
    %125 = vector.load %arg1[%124, %c0_25, %c0_26] : memref<8x8x256xf32, #tpu.memory_space<vmem>>, vector<1x8x256xf32>
    %126 = vector.shape_cast %125 : vector<1x8x256xf32> to vector<8x256xf32>
    %127 = arith.addf %123, %126 : vector<8x256xf32>
    %128 = vector.extract_strided_slice %127 {offsets = [0, 0], sizes = [8, 192], strides = [1, 1]} : vector<8x256xf32> to vector<8x192xf32>
    %129 = arith.negf %128 : vector<8x192xf32>
    %130 = math.exp %129 : vector<8x192xf32>
    %cst_27 = arith.constant 1.000000e+00 : f32
    %131 = vector.broadcast %cst_27 : f32 to vector<8x192xf32>
    %132 = arith.addf %131, %130 : vector<8x192xf32>
    %133 = arith.divf %131, %132 : vector<8x192xf32>
    %134 = vector.extract_strided_slice %133 {offsets = [0, 0], sizes = [8, 64], strides = [1, 1]} : vector<8x192xf32> to vector<8x64xf32>
    %135 = vector.extract_strided_slice %133 {offsets = [0, 64], sizes = [8, 64], strides = [1, 1]} : vector<8x192xf32> to vector<8x64xf32>
    %136 = vector.extract_strided_slice %133 {offsets = [0, 128], sizes = [8, 64], strides = [1, 1]} : vector<8x192xf32> to vector<8x64xf32>
    %137 = vector.extract_strided_slice %127 {offsets = [0, 192], sizes = [8, 64], strides = [1, 1]} : vector<8x256xf32> to vector<8x64xf32>
    %138 = math.tanh %137 : vector<8x64xf32>
    %139 = arith.mulf %135, %120 : vector<8x64xf32>
    %140 = arith.mulf %134, %138 : vector<8x64xf32>
    %141 = arith.addf %139, %140 : vector<8x64xf32>
    %142 = math.tanh %141 : vector<8x64xf32>
    %143 = arith.mulf %136, %142 : vector<8x64xf32>
    %c6_i32 = arith.constant 6 : i32
    %cst_28 = arith.constant dense<0.000000e+00> : vector<8x256xf32>
    %144 = tpu.matmul %143, %0, %cst_28 {dimension_numbers = #tpu.dot_dimension_numbers<[1], [0], [0], [1], [0, 0, 1, 1], [], []>} : vector<8x64xf32>, vector<64x256xf32>, vector<8x256xf32> -> vector<8x256xf32>
    %145 = arith.index_cast %c6_i32 : i32 to index
    %c0_29 = arith.constant 0 : index
    %c0_30 = arith.constant 0 : index
    %146 = vector.load %arg1[%145, %c0_29, %c0_30] : memref<8x8x256xf32, #tpu.memory_space<vmem>>, vector<1x8x256xf32>
    %147 = vector.shape_cast %146 : vector<1x8x256xf32> to vector<8x256xf32>
    %148 = arith.addf %144, %147 : vector<8x256xf32>
    %149 = vector.extract_strided_slice %148 {offsets = [0, 0], sizes = [8, 192], strides = [1, 1]} : vector<8x256xf32> to vector<8x192xf32>
    %150 = arith.negf %149 : vector<8x192xf32>
    %151 = math.exp %150 : vector<8x192xf32>
    %cst_31 = arith.constant 1.000000e+00 : f32
    %152 = vector.broadcast %cst_31 : f32 to vector<8x192xf32>
    %153 = arith.addf %152, %151 : vector<8x192xf32>
    %154 = arith.divf %152, %153 : vector<8x192xf32>
    %155 = vector.extract_strided_slice %154 {offsets = [0, 0], sizes = [8, 64], strides = [1, 1]} : vector<8x192xf32> to vector<8x64xf32>
    %156 = vector.extract_strided_slice %154 {offsets = [0, 64], sizes = [8, 64], strides = [1, 1]} : vector<8x192xf32> to vector<8x64xf32>
    %157 = vector.extract_strided_slice %154 {offsets = [0, 128], sizes = [8, 64], strides = [1, 1]} : vector<8x192xf32> to vector<8x64xf32>
    %158 = vector.extract_strided_slice %148 {offsets = [0, 192], sizes = [8, 64], strides = [1, 1]} : vector<8x256xf32> to vector<8x64xf32>
    %159 = math.tanh %158 : vector<8x64xf32>
    %160 = arith.mulf %156, %141 : vector<8x64xf32>
    %161 = arith.mulf %155, %159 : vector<8x64xf32>
    %162 = arith.addf %160, %161 : vector<8x64xf32>
    %163 = math.tanh %162 : vector<8x64xf32>
    %164 = arith.mulf %157, %163 : vector<8x64xf32>
    %c7_i32 = arith.constant 7 : i32
    %165 = vector.extract_strided_slice %164 {offsets = [0, 0], sizes = [8, 32], strides = [1, 1]} : vector<8x64xf32> to vector<8x32xf32>
    %166 = vector.extract_strided_slice %162 {offsets = [0, 0], sizes = [8, 32], strides = [1, 1]} : vector<8x64xf32> to vector<8x32xf32>
    %cst_32 = arith.constant dense<0.000000e+00> : vector<8x256xf32>
    %167 = tpu.matmul %164, %0, %cst_32 {dimension_numbers = #tpu.dot_dimension_numbers<[1], [0], [0], [1], [0, 0, 1, 1], [], []>} : vector<8x64xf32>, vector<64x256xf32>, vector<8x256xf32> -> vector<8x256xf32>
    %c7 = arith.constant 7 : index
    %c0_33 = arith.constant 0 : index
    %c0_34 = arith.constant 0 : index
    %168 = vector.load %arg1[%c7, %c0_33, %c0_34] : memref<8x8x256xf32, #tpu.memory_space<vmem>>, vector<1x8x256xf32>
    %169 = vector.shape_cast %168 : vector<1x8x256xf32> to vector<8x256xf32>
    %170 = arith.addf %167, %169 : vector<8x256xf32>
    %171 = vector.extract_strided_slice %170 {offsets = [0, 0], sizes = [8, 192], strides = [1, 1]} : vector<8x256xf32> to vector<8x192xf32>
    %172 = arith.negf %171 : vector<8x192xf32>
    %173 = math.exp %172 : vector<8x192xf32>
    %cst_35 = arith.constant 1.000000e+00 : f32
    %174 = vector.broadcast %cst_35 : f32 to vector<8x192xf32>
    %175 = arith.addf %174, %173 : vector<8x192xf32>
    %176 = arith.divf %174, %175 : vector<8x192xf32>
    %177 = vector.extract_strided_slice %176 {offsets = [0, 0], sizes = [8, 64], strides = [1, 1]} : vector<8x192xf32> to vector<8x64xf32>
    %178 = vector.extract_strided_slice %176 {offsets = [0, 64], sizes = [8, 64], strides = [1, 1]} : vector<8x192xf32> to vector<8x64xf32>
    %179 = vector.extract_strided_slice %176 {offsets = [0, 128], sizes = [8, 64], strides = [1, 1]} : vector<8x192xf32> to vector<8x64xf32>
    %180 = vector.extract_strided_slice %170 {offsets = [0, 192], sizes = [8, 64], strides = [1, 1]} : vector<8x256xf32> to vector<8x64xf32>
    %181 = math.tanh %180 : vector<8x64xf32>
    %182 = arith.mulf %178, %162 : vector<8x64xf32>
    %183 = arith.mulf %177, %181 : vector<8x64xf32>
    %184 = arith.addf %182, %183 : vector<8x64xf32>
    %185 = math.tanh %184 : vector<8x64xf32>
    %186 = arith.mulf %179, %185 : vector<8x64xf32>
    %187 = vector.extract_strided_slice %186 {offsets = [0, 32], sizes = [8, 32], strides = [1, 1]} : vector<8x64xf32> to vector<8x32xf32>
    %188 = vector.extract_strided_slice %184 {offsets = [0, 32], sizes = [8, 32], strides = [1, 1]} : vector<8x64xf32> to vector<8x32xf32>
    %c0_36 = arith.constant 0 : index
    %c0_37 = arith.constant 0 : index
    %189 = vector.load %arg3[%c0_36, %c0_37] : memref<32x128xf32, #tpu.memory_space<vmem>>, vector<32x128xf32>
    %cst_38 = arith.constant dense<0.000000e+00> : vector<8x128xf32>
    %190 = tpu.matmul %187, %189, %cst_38 {dimension_numbers = #tpu.dot_dimension_numbers<[1], [0], [0], [1], [0, 0, 1, 1], [], []>} : vector<8x32xf32>, vector<32x128xf32>, vector<8x128xf32> -> vector<8x128xf32>
    %c0_39 = arith.constant 0 : index
    %c0_40 = arith.constant 0 : index
    %191 = vector.load %arg4[%c0_39, %c0_40] : memref<1x128xf32, #tpu.memory_space<vmem>>, vector<1x128xf32>
    %192 = vector.broadcast %191 : vector<1x128xf32> to vector<8x128xf32>
    %193 = arith.addf %190, %192 : vector<8x128xf32>
    %c0_41 = arith.constant 0 : index
    %c0_42 = arith.constant 0 : index
    %194 = vector.load %arg5[%c0_41, %c0_42] : memref<8x128xf32, #tpu.memory_space<vmem>>, vector<8x128xf32>
    tpu.vector_store %arg5[%c0_41, %c0_42], %193 {strides = array<i32>} : memref<8x128xf32, #tpu.memory_space<vmem>>, vector<8x128xf32>,
    %195 = tpu.concatenate %165, %187, %166, %188 in 1 : vector<8x32xf32>, vector<8x32xf32>, vector<8x32xf32>, vector<8x32xf32> -> vector<8x128xf32>
    %c0_43 = arith.constant 0 : index
    %c0_44 = arith.constant 0 : index
    %196 = vector.load %arg6[%c0_43, %c0_44] : memref<8x128xf32, #tpu.memory_space<vmem>>, vector<8x128xf32>
    tpu.vector_store %arg6[%c0_43, %c0_44], %195 {strides = array<i32>} : memref<8x128xf32, #tpu.memory_space<vmem>>, vector<8x128xf32>,
    return
  }
}

</mosaic_0001>

<llo_original>
// kernel: rnn_classifier_forward.1
$region0: #{rnn_classifier_forward.1}
  #allocation0 [shape = 'u32[]', space=smem, size = 0x4, offset = 0x4, fixed_abs, tag = 'smem constant byte address 0x4 - core index']
  #allocation1 [shape = 'u32[144,128]{1,0:T(1,128)}', space=vmem, size = 0x12000, scoped, tag = 'internal scratch']
  %s0 = inlined_call_operand.vmem [shape: f32[8,128], index: 0, kind: input, shape index: {}]
  %s1 = inlined_call_operand.vmem [shape: f32[8,8,256], index: 1, kind: input, shape index: {}]
  %s2 = inlined_call_operand.vmem [shape: f32[64,256], index: 2, kind: input, shape index: {}]
  %s3 = inlined_call_operand.vmem [shape: f32[32,128], index: 3, kind: input, shape index: {}]
  %s4 = inlined_call_operand.vmem [shape: f32[1,128], index: 4, kind: input, shape index: {}]
  %s5 = inlined_call_operand.vmem [shape: f32[8,128], index: 5, kind: output, shape index: {0}]
  %s6 = inlined_call_operand.vmem [shape: f32[8,128], index: 6, kind: output, shape index: {1}]
  %7 = xla_tuple %s5, %s6
  %s8 = sld [smem:[#allocation0]]
  $region38: #{rnn_classifier_forward.1} parent=0
    _
  %s10 = ssub.s32 1, %s8
  %s11 = scalar_select 0, %s10, %s8
  // Predicated region
  $region2: #{rnn_classifier_forward.1} parent=0 // pred_check
    _
  $region3: #{rnn_classifier_forward.1} parent=0 // pred_check_branch
    %13 = sbr.rel (0) target = $region5
  $region4: #{rnn_classifier_forward.1} parent=0 // pred_region
    _
  $region5: #{rnn_classifier_forward.1} parent=0 // pred_fallthru
    _
  // Predicated region
  $region6: #{rnn_classifier_forward.1} parent=0 // pred_check
    _
  $region7: #{rnn_classifier_forward.1} parent=0 // pred_check_branch
    %15 = sbr.rel (0) target = $region9
  $region8: #{rnn_classifier_forward.1} parent=0 // pred_region
    _
  $region9: #{rnn_classifier_forward.1} parent=0 // pred_fallthru
    _
  // Predicated region
  $region10: #{rnn_classifier_forward.1} parent=0 // pred_check
    _
  $region11: #{rnn_classifier_forward.1} parent=0 // pred_check_branch
    %17 = sbr.rel (0) target = $region13
  $region12: #{rnn_classifier_forward.1} parent=0 // pred_region
    _
  $region13: #{rnn_classifier_forward.1} parent=0 // pred_fallthru
    _
  // Predicated region
  $region14: #{rnn_classifier_forward.1} parent=0 // pred_check
    _
  $region15: #{rnn_classifier_forward.1} parent=0 // pred_check_branch
    %19 = sbr.rel (0) target = $region17
  $region16: #{rnn_classifier_forward.1} parent=0 // pred_region
    _
  $region17: #{rnn_classifier_forward.1} parent=0 // pred_fallthru
    _
  // Predicated region
  $region18: #{rnn_classifier_forward.1} parent=0 // pred_check
    _
  $region19: #{rnn_classifier_forward.1} parent=0 // pred_check_branch
    %21 = sbr.rel (0) target = $region21
  $region20: #{rnn_classifier_forward.1} parent=0 // pred_region
    _
  $region21: #{rnn_classifier_forward.1} parent=0 // pred_fallthru
    _
  %v22 = vld [vmem:[%s2] sm:$0xff]
  %v23 = vld [vmem:[%s2 + $0x8] sm:$0xff]
  %v24 = vld [vmem:[%s2 + $0x10] sm:$0xff]
  %v25 = vld [vmem:[%s2 + $0x18] sm:$0xff]
  %v26 = vld [vmem:[%s2 + $0x20] sm:$0xff]
  %v27 = vld [vmem:[%s2 + $0x28] sm:$0xff]
  %v28 = vld [vmem:[%s2 + $0x30] sm:$0xff]
  %v29 = vld [vmem:[%s2 + $0x38] sm:$0xff]
  %v30 = vld [vmem:[%s2 + $0x40] sm:$0xff]
  %v31 = vld [vmem:[%s2 + $0x48] sm:$0xff]
  %v32 = vld [vmem:[%s2 + $0x50] sm:$0xff]
  %v33 = vld [vmem:[%s2 + $0x58] sm:$0xff]
  %v34 = vld [vmem:[%s2 + $0x60] sm:$0xff]
  %v35 = vld [vmem:[%s2 + $0x68] sm:$0xff]
  %v36 = vld [vmem:[%s2 + $0x70] sm:$0xff]
  %v37 = vld [vmem:[%s2 + $0x78] sm:$0xff]
  %v38 = vld [vmem:[%s0] sm:$0xff]
  %v39 = vxor.u32 %v38, 2147483648
  %v40 = vmul.f32 %v39, 1.442695
  %v41 = vpow.pop %v40
  %v42 = vadd.f32 %v41, 1.0
  %v43 = vrcp.pop %v42
  %v44 = vmul.f32 1.0, %v43
  %v45 = vtanh.pop %v38
  %47 = vrot.lane.b32.xlu0 %v45, 32
  %v48 = vpop.permute.xlu0 %47
  %v50 = vmul.f32 %v44, %v48
  %v51 = vtanh.pop %v50
  %53 = vrot.lane.b32.xlu0 %v51, 64
  %v54 = vpop.permute.xlu0 %53
  %v56 = vmul.f32 %v44, %v54
  %58 = vrot.lane.b32.xlu0 %v56, 64
  %v59 = vpop.permute.xlu0 %58
  %vm61 = vcmask 261120
  %v62 = vsel %vm61, %v59, 0.0
  %v63 = vsel %vm61, %v50, 0.0
  %v64 = vld [vmem:[%s1] sm:$0xff]
  %v65 = vld [vmem:[%s1 + $0x8] sm:$0xff]
  %vm66 = vcmask 523264
  %v68 = vsel %vm66, %v62, 0
  %70 = vmatprep.subr.mxu0 0.0
  %71 = vmatpush1.msra.mxu0 0.0
  %72 = vmatprep.subr.mxu0 0.0
  %73 = vmatpush1.msra.mxu0 0.0
  %74 = vmatprep.subr.mxu0 0.0
  %75 = vmatpush1.msra.mxu0 0.0
  %76 = vmatprep.subr.mxu0 0.0
  %77 = vmatpush1.msra.mxu0 0.0
  %78 = vmatprep.subr.mxu0 0.0
  %79 = vmatpush1.msra.mxu0 0.0
  %80 = vmatprep.subr.mxu0 0.0
  %81 = vmatpush1.msra.mxu0 0.0
  %82 = vmatprep.subr.mxu0 0.0
  %83 = vmatpush1.msra.mxu0 0.0
  %84 = vmatprep.subr.mxu0 0.0
  %85 = vmatpush1.msra.mxu0 0.0
  %86 = vmatprep.subr.mxu0 %v37
  %87 = vmatpush1.msra.mxu0 %v36
  %88 = vmatprep.subr.mxu0 %v35
  %89 = vmatpush1.msra.mxu0 %v34
  %90 = vmatprep.subr.mxu0 %v33
  %91 = vmatpush1.msra.mxu0 %v32
  %92 = vmatprep.subr.mxu0 %v31
  %93 = vmatpush1.msra.mxu0 %v30
  %94 = vmatprep.subr.mxu0 %v29
  %95 = vmatpush1.msra.mxu0 %v28
  %96 = vmatprep.subr.mxu0 %v27
  %97 = vmatpush1.msra.mxu0 %v26
  %98 = vmatprep.subr.mxu0 %v25
  %99 = vmatpush1.msra.mxu0 %v24
  %100 = vmatprep.subr.mxu0 %v23
  %101 = vmatpush1.msra.mxu0 %v22
  %102 = vmatprep.subr.mxu0 0.0
  %103 = vmatpush2.msra.mxu0 0.0
  %104 = vmatprep.subr.mxu0 0.0
  %105 = vmatpush2.msra.mxu0 0.0
  %106 = vmatprep.subr.mxu0 0.0
  %107 = vmatpush2.msra.mxu0 0.0
  %108 = vmatprep.subr.mxu0 0.0
  %109 = vmatpush2.msra.mxu0 0.0
  %110 = vmatprep.subr.mxu0 0.0
  %111 = vmatpush2.msra.mxu0 0.0
  %112 = vmatprep.subr.mxu0 0.0
  %113 = vmatpush2.msra.mxu0 0.0
  %114 = vmatprep.subr.mxu0 0.0
  %115 = vmatpush2.msra.mxu0 0.0
  %116 = vmatprep.subr.mxu0 0.0
  %117 = vmatpush2.msra.mxu0 0.0
  %118 = vmatprep.subr.mxu0 0.0
  %119 = vmatpush2.msra.mxu0 0.0
  %120 = vmatprep.subr.mxu0 0.0
  %121 = vmatpush2.msra.mxu0 0.0
  %122 = vmatprep.subr.mxu0 0.0
  %123 = vmatpush2.msra.mxu0 0.0
  %124 = vmatprep.subr.mxu0 0.0
  %125 = vmatpush2.msra.mxu0 0.0
  %126 = vmatprep.subr.mxu0 0.0
  %127 = vmatpush2.msra.mxu0 0.0
  %128 = vmatprep.subr.mxu0 0.0
  %129 = vmatpush2.msra.mxu0 0.0
  %130 = vmatprep.subr.mxu0 0.0
  %131 = vmatpush2.msra.mxu0 0.0
  %132 = vmatprep.subr.mxu0 0.0
  %133 = vmatpush2.msra.mxu0 0.0
  %134 = vmatprep.mubr.f32.mxu0 0.0
  %135 = vmatmul.mubr.f32.gmra.mxu0 %v68
  %v136 = vpop.f32.mrf.mxu0
  %v137 = vadd.f32 %v64, %v136
  %v138 = vpop.f32.mrf.mxu0
  %v139 = vadd.f32 %v65, %v138
  %140 = vdwg.mxu0
  %v141 = vxor.u32 %v137, 2147483648
  %v142 = vxor.u32 %v139, 2147483648
  %v143 = vmul.f32 %v141, 1.442695
  %v144 = vpow.pop %v143
  %v145 = vmul.f32 %v142, 1.442695
  %v146 = vpow.pop %v145
  %v147 = vadd.f32 %v144, 1.0
  %v148 = vadd.f32 %v146, 1.0
  %v149 = vrcp.pop %v147
  %v150 = vmul.f32 1.0, %v149
  %v151 = vrcp.pop %v148
  %v152 = vmul.f32 1.0, %v151
  %v153 = vtanh.pop %v139
  %155 = vrot.lane.b32.xlu0 %v63, 64
  %v156 = vpop.permute.xlu0 %155
  %v158 = vmul.f32 %v150, %v156
  %160 = vrot.lane.b32.xlu0 %v153, 64
  %v161 = vpop.permute.xlu0 %160
  %v163 = vmul.f32 %v150, %v161
  %165 = vrot.lane.b32.xlu0 %v163, 64
  %v166 = vpop.permute.xlu0 %165
  %v168 = vadd.f32 %v158, %v166
  %v169 = vtanh.pop %v168
  %171 = vrot.lane.b32.xlu0 %v169, 64
  %v172 = vpop.permute.xlu0 %171
  %v174 = vmul.f32 %v152, %v172
  %s175 = scalar_lea.vmem %s1, 16
  %v176 = vld [vmem:[%s175] sm:$0xff]
  %v177 = vld [vmem:[%s175 + $0x8] sm:$0xff]
  %v179 = vsel %vm66, %v174, 0
  %181 = vmatprep.subr.mxu0 0.0
  %182 = vmatpush1.msra.mxu0 0.0
  %183 = vmatprep.subr.mxu0 0.0
  %184 = vmatpush1.msra.mxu0 0.0
  %185 = vmatprep.subr.mxu0 0.0
  %186 = vmatpush1.msra.mxu0 0.0
  %187 = vmatprep.subr.mxu0 0.0
  %188 = vmatpush1.msra.mxu0 0.0
  %189 = vmatprep.subr.mxu0 0.0
  %190 = vmatpush1.msra.mxu0 0.0
  %191 = vmatprep.subr.mxu0 0.0
  %192 = vmatpush1.msra.mxu0 0.0
  %193 = vmatprep.subr.mxu0 0.0
  %194 = vmatpush1.msra.mxu0 0.0
  %195 = vmatprep.subr.mxu0 0.0
  %196 = vmatpush1.msra.mxu0 0.0
  %197 = vmatprep.subr.mxu0 %v37
  %198 = vmatpush1.msra.mxu0 %v36
  %199 = vmatprep.subr.mxu0 %v35
  %200 = vmatpush1.msra.mxu0 %v34
  %201 = vmatprep.subr.mxu0 %v33
  %202 = vmatpush1.msra.mxu0 %v32
  %203 = vmatprep.subr.mxu0 %v31
  %204 = vmatpush1.msra.mxu0 %v30
  %205 = vmatprep.subr.mxu0 %v29
  %206 = vmatpush1.msra.mxu0 %v28
  %207 = vmatprep.subr.mxu0 %v27
  %208 = vmatpush1.msra.mxu0 %v26
  %209 = vmatprep.subr.mxu0 %v25
  %210 = vmatpush1.msra.mxu0 %v24
  %211 = vmatprep.subr.mxu0 %v23
  %212 = vmatpush1.msra.mxu0 %v22
  %213 = vmatprep.subr.mxu0 0.0
  %214 = vmatpush2.msra.mxu0 0.0
  %215 = vmatprep.subr.mxu0 0.0
  %216 = vmatpush2.msra.mxu0 0.0
  %217 = vmatprep.subr.mxu0 0.0
  %218 = vmatpush2.msra.mxu0 0.0
  %219 = vmatprep.subr.mxu0 0.0
  %220 = vmatpush2.msra.mxu0 0.0
  %221 = vmatprep.subr.mxu0 0.0
  %222 = vmatpush2.msra.mxu0 0.0
  %223 = vmatprep.subr.mxu0 0.0
  %224 = vmatpush2.msra.mxu0 0.0
  %225 = vmatprep.subr.mxu0 0.0
  %226 = vmatpush2.msra.mxu0 0.0
  %227 = vmatprep.subr.mxu0 0.0
  %228 = vmatpush2.msra.mxu0 0.0
  %229 = vmatprep.subr.mxu0 0.0
  %230 = vmatpush2.msra.mxu0 0.0
  %231 = vmatprep.subr.mxu0 0.0
  %232 = vmatpush2.msra.mxu0 0.0
  %233 = vmatprep.subr.mxu0 0.0
  %234 = vmatpush2.msra.mxu0 0.0
  %235 = vmatprep.subr.mxu0 0.0
  %236 = vmatpush2.msra.mxu0 0.0
  %237 = vmatprep.subr.mxu0 0.0
  %238 = vmatpush2.msra.mxu0 0.0
  %239 = vmatprep.subr.mxu0 0.0
  %240 = vmatpush2.msra.mxu0 0.0
  %241 = vmatprep.subr.mxu0 0.0
  %242 = vmatpush2.msra.mxu0 0.0
  %243 = vmatprep.subr.mxu0 0.0
  %244 = vmatpush2.msra.mxu0 0.0
  %245 = vmatprep.mubr.f32.mxu0 0.0
  %246 = vmatmul.mubr.f32.gmra.mxu0 %v179
  %v247 = vpop.f32.mrf.mxu0
  %v248 = vadd.f32 %v176, %v247
  %v249 = vpop.f32.mrf.mxu0
  %v250 = vadd.f32 %v177, %v249
  %251 = vdwg.mxu0
  %v252 = vxor.u32 %v248, 2147483648
  %v253 = vxor.u32 %v250, 2147483648
  %v254 = vmul.f32 %v252, 1.442695
  %v255 = vpow.pop %v254
  %v256 = vmul.f32 %v253, 1.442695
  %v257 = vpow.pop %v256
  %v258 = vadd.f32 %v255, 1.0
  %v259 = vadd.f32 %v257, 1.0
  %v260 = vrcp.pop %v258
  %v261 = vmul.f32 1.0, %v260
  %v262 = vrcp.pop %v259
  %v263 = vmul.f32 1.0, %v262
  %v264 = vtanh.pop %v250
  %v265 = vmul.f32 %v261, %v168
  %267 = vrot.lane.b32.xlu0 %v264, 64
  %v268 = vpop.permute.xlu0 %267
  %v270 = vmul.f32 %v261, %v268
  %272 = vrot.lane.b32.xlu0 %v270, 64
  %v273 = vpop.permute.xlu0 %272
  %v275 = vadd.f32 %v265, %v273
  %v276 = vtanh.pop %v275
  %278 = vrot.lane.b32.xlu0 %v276, 64
  %v279 = vpop.permute.xlu0 %278
  %v281 = vmul.f32 %v263, %v279
  %s282 = scalar_lea.vmem %s1, 32
  %v283 = vld [vmem:[%s282] sm:$0xff]
  %v284 = vld [vmem:[%s282 + $0x8] sm:$0xff]
  %v286 = vsel %vm66, %v281, 0
  %288 = vmatprep.subr.mxu0 0.0
  %289 = vmatpush1.msra.mxu0 0.0
  %290 = vmatprep.subr.mxu0 0.0
  %291 = vmatpush1.msra.mxu0 0.0
  %292 = vmatprep.subr.mxu0 0.0
  %293 = vmatpush1.msra.mxu0 0.0
  %294 = vmatprep.subr.mxu0 0.0
  %295 = vmatpush1.msra.mxu0 0.0
  %296 = vmatprep.subr.mxu0 0.0
  %297 = vmatpush1.msra.mxu0 0.0
  %298 = vmatprep.subr.mxu0 0.0
  %299 = vmatpush1.msra.mxu0 0.0
  %300 = vmatprep.subr.mxu0 0.0
  %301 = vmatpush1.msra.mxu0 0.0
  %302 = vmatprep.subr.mxu0 0.0
  %303 = vmatpush1.msra.mxu0 0.0
  %304 = vmatprep.subr.mxu0 %v37
  %305 = vmatpush1.msra.mxu0 %v36
  %306 = vmatprep.subr.mxu0 %v35
  %307 = vmatpush1.msra.mxu0 %v34
  %308 = vmatprep.subr.mxu0 %v33
  %309 = vmatpush1.msra.mxu0 %v32
  %310 = vmatprep.subr.mxu0 %v31
  %311 = vmatpush1.msra.mxu0 %v30
  %312 = vmatprep.subr.mxu0 %v29
  %313 = vmatpush1.msra.mxu0 %v28
  %314 = vmatprep.subr.mxu0 %v27
  %315 = vmatpush1.msra.mxu0 %v26
  %316 = vmatprep.subr.mxu0 %v25
  %317 = vmatpush1.msra.mxu0 %v24
  %318 = vmatprep.subr.mxu0 %v23
  %319 = vmatpush1.msra.mxu0 %v22
  %320 = vmatprep.subr.mxu0 0.0
  %321 = vmatpush2.msra.mxu0 0.0
  %322 = vmatprep.subr.mxu0 0.0
  %323 = vmatpush2.msra.mxu0 0.0
  %324 = vmatprep.subr.mxu0 0.0
  %325 = vmatpush2.msra.mxu0 0.0
  %326 = vmatprep.subr.mxu0 0.0
  %327 = vmatpush2.msra.mxu0 0.0
  %328 = vmatprep.subr.mxu0 0.0
  %329 = vmatpush2.msra.mxu0 0.0
  %330 = vmatprep.subr.mxu0 0.0
  %331 = vmatpush2.msra.mxu0 0.0
  %332 = vmatprep.subr.mxu0 0.0
  %333 = vmatpush2.msra.mxu0 0.0
  %334 = vmatprep.subr.mxu0 0.0
  %335 = vmatpush2.msra.mxu0 0.0
  %336 = vmatprep.subr.mxu0 0.0
  %337 = vmatpush2.msra.mxu0 0.0
  %338 = vmatprep.subr.mxu0 0.0
  %339 = vmatpush2.msra.mxu0 0.0
  %340 = vmatprep.subr.mxu0 0.0
  %341 = vmatpush2.msra.mxu0 0.0
  %342 = vmatprep.subr.mxu0 0.0
  %343 = vmatpush2.msra.mxu0 0.0
  %344 = vmatprep.subr.mxu0 0.0
  %345 = vmatpush2.msra.mxu0 0.0
  %346 = vmatprep.subr.mxu0 0.0
  %347 = vmatpush2.msra.mxu0 0.0
  %348 = vmatprep.subr.mxu0 0.0
  %349 = vmatpush2.msra.mxu0 0.0
  %350 = vmatprep.subr.mxu0 0.0
  %351 = vmatpush2.msra.mxu0 0.0
  %352 = vmatprep.mubr.f32.mxu0 0.0
  %353 = vmatmul.mubr.f32.gmra.mxu0 %v286
  %v354 = vpop.f32.mrf.mxu0
  %v355 = vadd.f32 %v283, %v354
  %v356 = vpop.f32.mrf.mxu0
  %v357 = vadd.f32 %v284, %v356
  %358 = vdwg.mxu0
  %v359 = vxor.u32 %v355, 2147483648
  %v360 = vxor.u32 %v357, 2147483648
  %v361 = vmul.f32 %v359, 1.442695
  %v362 = vpow.pop %v361
  %v363 = vmul.f32 %v360, 1.442695
  %v364 = vpow.pop %v363
  %v365 = vadd.f32 %v362, 1.0
  %v366 = vadd.f32 %v364, 1.0
  %v367 = vrcp.pop %v365
  %v368 = vmul.f32 1.0, %v367
  %v369 = vrcp.pop %v366
  %v370 = vmul.f32 1.0, %v369
  %v371 = vtanh.pop %v357
  %v372 = vmul.f32 %v368, %v275
  %374 = vrot.lane.b32.xlu0 %v371, 64
  %v375 = vpop.permute.xlu0 %374
  %v377 = vmul.f32 %v368, %v375
  %379 = vrot.lane.b32.xlu0 %v377, 64
  %v380 = vpop.permute.xlu0 %379
  %v382 = vadd.f32 %v372, %v380
  %v383 = vtanh.pop %v382
  %385 = vrot.lane.b32.xlu0 %v383, 64
  %v386 = vpop.permute.xlu0 %385
  %v388 = vmul.f32 %v370, %v386
  %s389 = scalar_lea.vmem %s1, 48
  %v390 = vld [vmem:[%s389] sm:$0xff]
  %v391 = vld [vmem:[%s389 + $0x8] sm:$0xff]
  %v393 = vsel %vm66, %v388, 0
  %395 = vmatprep.subr.mxu0 0.0
  %396 = vmatpush1.msra.mxu0 0.0
  %397 = vmatprep.subr.mxu0 0.0
  %398 = vmatpush1.msra.mxu0 0.0
  %399 = vmatprep.subr.mxu0 0.0
  %400 = vmatpush1.msra.mxu0 0.0
  %401 = vmatprep.subr.mxu0 0.0
  %402 = vmatpush1.msra.mxu0 0.0
  %403 = vmatprep.subr.mxu0 0.0
  %404 = vmatpush1.msra.mxu0 0.0
  %405 = vmatprep.subr.mxu0 0.0
  %406 = vmatpush1.msra.mxu0 0.0
  %407 = vmatprep.subr.mxu0 0.0
  %408 = vmatpush1.msra.mxu0 0.0
  %409 = vmatprep.subr.mxu0 0.0
  %410 = vmatpush1.msra.mxu0 0.0
  %411 = vmatprep.subr.mxu0 %v37
  %412 = vmatpush1.msra.mxu0 %v36
  %413 = vmatprep.subr.mxu0 %v35
  %414 = vmatpush1.msra.mxu0 %v34
  %415 = vmatprep.subr.mxu0 %v33
  %416 = vmatpush1.msra.mxu0 %v32
  %417 = vmatprep.subr.mxu0 %v31
  %418 = vmatpush1.msra.mxu0 %v30
  %419 = vmatprep.subr.mxu0 %v29
  %420 = vmatpush1.msra.mxu0 %v28
  %421 = vmatprep.subr.mxu0 %v27
  %422 = vmatpush1.msra.mxu0 %v26
  %423 = vmatprep.subr.mxu0 %v25
  %424 = vmatpush1.msra.mxu0 %v24
  %425 = vmatprep.subr.mxu0 %v23
  %426 = vmatpush1.msra.mxu0 %v22
  %427 = vmatprep.subr.mxu0 0.0
  %428 = vmatpush2.msra.mxu0 0.0
  %429 = vmatprep.subr.mxu0 0.0
  %430 = vmatpush2.msra.mxu0 0.0
  %431 = vmatprep.subr.mxu0 0.0
  %432 = vmatpush2.msra.mxu0 0.0
  %433 = vmatprep.subr.mxu0 0.0
  %434 = vmatpush2.msra.mxu0 0.0
  %435 = vmatprep.subr.mxu0 0.0
  %436 = vmatpush2.msra.mxu0 0.0
  %437 = vmatprep.subr.mxu0 0.0
  %438 = vmatpush2.msra.mxu0 0.0
  %439 = vmatprep.subr.mxu0 0.0
  %440 = vmatpush2.msra.mxu0 0.0
  %441 = vmatprep.subr.mxu0 0.0
  %442 = vmatpush2.msra.mxu0 0.0
  %443 = vmatprep.subr.mxu0 0.0
  %444 = vmatpush2.msra.mxu0 0.0
  %445 = vmatprep.subr.mxu0 0.0
  %446 = vmatpush2.msra.mxu0 0.0
  %447 = vmatprep.subr.mxu0 0.0
  %448 = vmatpush2.msra.mxu0 0.0
  %449 = vmatprep.subr.mxu0 0.0
  %450 = vmatpush2.msra.mxu0 0.0
  %451 = vmatprep.subr.mxu0 0.0
  %452 = vmatpush2.msra.mxu0 0.0
  %453 = vmatprep.subr.mxu0 0.0
  %454 = vmatpush2.msra.mxu0 0.0
  %455 = vmatprep.subr.mxu0 0.0
  %456 = vmatpush2.msra.mxu0 0.0
  %457 = vmatprep.subr.mxu0 0.0
  %458 = vmatpush2.msra.mxu0 0.0
  %459 = vmatprep.mubr.f32.mxu0 0.0
  %460 = vmatmul.mubr.f32.gmra.mxu0 %v393
  %v461 = vpop.f32.mrf.mxu0
  %v462 = vadd.f32 %v390, %v461
  %v463 = vpop.f32.mrf.mxu0
  %v464 = vadd.f32 %v391, %v463
  %465 = vdwg.mxu0
  %v466 = vxor.u32 %v462, 2147483648
  %v467 = vxor.u32 %v464, 2147483648
  %v468 = vmul.f32 %v466, 1.442695
  %v469 = vpow.pop %v468
  %v470 = vmul.f32 %v467, 1.442695
  %v471 = vpow.pop %v470
  %v472 = vadd.f32 %v469, 1.0
  %v473 = vadd.f32 %v471, 1.0
  %v474 = vrcp.pop %v472
  %v475 = vmul.f32 1.0, %v474
  %v476 = vrcp.pop %v473
  %v477 = vmul.f32 1.0, %v476
  %v478 = vtanh.pop %v464
  %v479 = vmul.f32 %v475, %v382
  %481 = vrot.lane.b32.xlu0 %v478, 64
  %v482 = vpop.permute.xlu0 %481
  %v484 = vmul.f32 %v475, %v482
  %486 = vrot.lane.b32.xlu0 %v484, 64
  %v487 = vpop.permute.xlu0 %486
  %v489 = vadd.f32 %v479, %v487
  %v490 = vtanh.pop %v489
  %492 = vrot.lane.b32.xlu0 %v490, 64
  %v493 = vpop.permute.xlu0 %492
  %v495 = vmul.f32 %v477, %v493
  %s496 = scalar_lea.vmem %s1, 64
  %v497 = vld [vmem:[%s496] sm:$0xff]
  %v498 = vld [vmem:[%s496 + $0x8] sm:$0xff]
  %v500 = vsel %vm66, %v495, 0
  %502 = vmatprep.subr.mxu0 0.0
  %503 = vmatpush1.msra.mxu0 0.0
  %504 = vmatprep.subr.mxu0 0.0
  %505 = vmatpush1.msra.mxu0 0.0
  %506 = vmatprep.subr.mxu0 0.0
  %507 = vmatpush1.msra.mxu0 0.0
  %508 = vmatprep.subr.mxu0 0.0
  %509 = vmatpush1.msra.mxu0 0.0
  %510 = vmatprep.subr.mxu0 0.0
  %511 = vmatpush1.msra.mxu0 0.0
  %512 = vmatprep.subr.mxu0 0.0
  %513 = vmatpush1.msra.mxu0 0.0
  %514 = vmatprep.subr.mxu0 0.0
  %515 = vmatpush1.msra.mxu0 0.0
  %516 = vmatprep.subr.mxu0 0.0
  %517 = vmatpush1.msra.mxu0 0.0
  %518 = vmatprep.subr.mxu0 %v37
  %519 = vmatpush1.msra.mxu0 %v36
  %520 = vmatprep.subr.mxu0 %v35
  %521 = vmatpush1.msra.mxu0 %v34
  %522 = vmatprep.subr.mxu0 %v33
  %523 = vmatpush1.msra.mxu0 %v32
  %524 = vmatprep.subr.mxu0 %v31
  %525 = vmatpush1.msra.mxu0 %v30
  %526 = vmatprep.subr.mxu0 %v29
  %527 = vmatpush1.msra.mxu0 %v28
  %528 = vmatprep.subr.mxu0 %v27
  %529 = vmatpush1.msra.mxu0 %v26
  %530 = vmatprep.subr.mxu0 %v25
  %531 = vmatpush1.msra.mxu0 %v24
  %532 = vmatprep.subr.mxu0 %v23
  %533 = vmatpush1.msra.mxu0 %v22
  %534 = vmatprep.subr.mxu0 0.0
  %535 = vmatpush2.msra.mxu0 0.0
  %536 = vmatprep.subr.mxu0 0.0
  %537 = vmatpush2.msra.mxu0 0.0
  %538 = vmatprep.subr.mxu0 0.0
  %539 = vmatpush2.msra.mxu0 0.0
  %540 = vmatprep.subr.mxu0 0.0
  %541 = vmatpush2.msra.mxu0 0.0
  %542 = vmatprep.subr.mxu0 0.0
  %543 = vmatpush2.msra.mxu0 0.0
  %544 = vmatprep.subr.mxu0 0.0
  %545 = vmatpush2.msra.mxu0 0.0
  %546 = vmatprep.subr.mxu0 0.0
  %547 = vmatpush2.msra.mxu0 0.0
  %548 = vmatprep.subr.mxu0 0.0
  %549 = vmatpush2.msra.mxu0 0.0
  %550 = vmatprep.subr.mxu0 0.0
  %551 = vmatpush2.msra.mxu0 0.0
  %552 = vmatprep.subr.mxu0 0.0
  %553 = vmatpush2.msra.mxu0 0.0
  %554 = vmatprep.subr.mxu0 0.0
  %555 = vmatpush2.msra.mxu0 0.0
  %556 = vmatprep.subr.mxu0 0.0
  %557 = vmatpush2.msra.mxu0 0.0
  %558 = vmatprep.subr.mxu0 0.0
  %559 = vmatpush2.msra.mxu0 0.0
  %560 = vmatprep.subr.mxu0 0.0
  %561 = vmatpush2.msra.mxu0 0.0
  %562 = vmatprep.subr.mxu0 0.0
  %563 = vmatpush2.msra.mxu0 0.0
  %564 = vmatprep.subr.mxu0 0.0
  %565 = vmatpush2.msra.mxu0 0.0
  %566 = vmatprep.mubr.f32.mxu0 0.0
  %567 = vmatmul.mubr.f32.gmra.mxu0 %v500
  %v568 = vpop.f32.mrf.mxu0
  %v569 = vadd.f32 %v497, %v568
  %v570 = vpop.f32.mrf.mxu0
  %v571 = vadd.f32 %v498, %v570
  %572 = vdwg.mxu0
  %v573 = vxor.u32 %v569, 2147483648
  %v574 = vxor.u32 %v571, 2147483648
  %v575 = vmul.f32 %v573, 1.442695
  %v576 = vpow.pop %v575
  %v577 = vmul.f32 %v574, 1.442695
  %v578 = vpow.pop %v577
  %v579 = vadd.f32 %v576, 1.0
  %v580 = vadd.f32 %v578, 1.0
  %v581 = vrcp.pop %v579
  %v582 = vmul.f32 1.0, %v581
  %v583 = vrcp.pop %v580
  %v584 = vmul.f32 1.0, %v583
  %v585 = vtanh.pop %v571
  %v586 = vmul.f32 %v582, %v489
  %588 = vrot.lane.b32.xlu0 %v585, 64
  %v589 = vpop.permute.xlu0 %588
  %v591 = vmul.f32 %v582, %v589
  %593 = vrot.lane.b32.xlu0 %v591, 64
  %v594 = vpop.permute.xlu0 %593
  %v596 = vadd.f32 %v586, %v594
  %v597 = vtanh.pop %v596
  %599 = vrot.lane.b32.xlu0 %v597, 64
  %v600 = vpop.permute.xlu0 %599
  %v602 = vmul.f32 %v584, %v600
  %s603 = scalar_lea.vmem %s1, 80
  %v604 = vld [vmem:[%s603] sm:$0xff]
  %v605 = vld [vmem:[%s603 + $0x8] sm:$0xff]
  %v607 = vsel %vm66, %v602, 0
  %609 = vmatprep.subr.mxu0 0.0
  %610 = vmatpush1.msra.mxu0 0.0
  %611 = vmatprep.subr.mxu0 0.0
  %612 = vmatpush1.msra.mxu0 0.0
  %613 = vmatprep.subr.mxu0 0.0
  %614 = vmatpush1.msra.mxu0 0.0
  %615 = vmatprep.subr.mxu0 0.0
  %616 = vmatpush1.msra.mxu0 0.0
  %617 = vmatprep.subr.mxu0 0.0
  %618 = vmatpush1.msra.mxu0 0.0
  %619 = vmatprep.subr.mxu0 0.0
  %620 = vmatpush1.msra.mxu0 0.0
  %621 = vmatprep.subr.mxu0 0.0
  %622 = vmatpush1.msra.mxu0 0.0
  %623 = vmatprep.subr.mxu0 0.0
  %624 = vmatpush1.msra.mxu0 0.0
  %625 = vmatprep.subr.mxu0 %v37
  %626 = vmatpush1.msra.mxu0 %v36
  %627 = vmatprep.subr.mxu0 %v35
  %628 = vmatpush1.msra.mxu0 %v34
  %629 = vmatprep.subr.mxu0 %v33
  %630 = vmatpush1.msra.mxu0 %v32
  %631 = vmatprep.subr.mxu0 %v31
  %632 = vmatpush1.msra.mxu0 %v30
  %633 = vmatprep.subr.mxu0 %v29
  %634 = vmatpush1.msra.mxu0 %v28
  %635 = vmatprep.subr.mxu0 %v27
  %636 = vmatpush1.msra.mxu0 %v26
  %637 = vmatprep.subr.mxu0 %v25
  %638 = vmatpush1.msra.mxu0 %v24
  %639 = vmatprep.subr.mxu0 %v23
  %640 = vmatpush1.msra.mxu0 %v22
  %641 = vmatprep.subr.mxu0 0.0
  %642 = vmatpush2.msra.mxu0 0.0
  %643 = vmatprep.subr.mxu0 0.0
  %644 = vmatpush2.msra.mxu0 0.0
  %645 = vmatprep.subr.mxu0 0.0
  %646 = vmatpush2.msra.mxu0 0.0
  %647 = vmatprep.subr.mxu0 0.0
  %648 = vmatpush2.msra.mxu0 0.0
  %649 = vmatprep.subr.mxu0 0.0
  %650 = vmatpush2.msra.mxu0 0.0
  %651 = vmatprep.subr.mxu0 0.0
  %652 = vmatpush2.msra.mxu0 0.0
  %653 = vmatprep.subr.mxu0 0.0
  %654 = vmatpush2.msra.mxu0 0.0
  %655 = vmatprep.subr.mxu0 0.0
  %656 = vmatpush2.msra.mxu0 0.0
  %657 = vmatprep.subr.mxu0 0.0
  %658 = vmatpush2.msra.mxu0 0.0
  %659 = vmatprep.subr.mxu0 0.0
  %660 = vmatpush2.msra.mxu0 0.0
  %661 = vmatprep.subr.mxu0 0.0
  %662 = vmatpush2.msra.mxu0 0.0
  %663 = vmatprep.subr.mxu0 0.0
  %664 = vmatpush2.msra.mxu0 0.0
  %665 = vmatprep.subr.mxu0 0.0
  %666 = vmatpush2.msra.mxu0 0.0
  %667 = vmatprep.subr.mxu0 0.0
  %668 = vmatpush2.msra.mxu0 0.0
  %669 = vmatprep.subr.mxu0 0.0
  %670 = vmatpush2.msra.mxu0 0.0
  %671 = vmatprep.subr.mxu0 0.0
  %672 = vmatpush2.msra.mxu0 0.0
  %673 = vmatprep.mubr.f32.mxu0 0.0
  %674 = vmatmul.mubr.f32.gmra.mxu0 %v607
  %v675 = vpop.f32.mrf.mxu0
  %v676 = vadd.f32 %v604, %v675
  %v677 = vpop.f32.mrf.mxu0
  %v678 = vadd.f32 %v605, %v677
  %679 = vdwg.mxu0
  %v680 = vxor.u32 %v676, 2147483648
  %v681 = vxor.u32 %v678, 2147483648
  %v682 = vmul.f32 %v680, 1.442695
  %v683 = vpow.pop %v682
  %v684 = vmul.f32 %v681, 1.442695
  %v685 = vpow.pop %v684
  %v686 = vadd.f32 %v683, 1.0
  %v687 = vadd.f32 %v685, 1.0
  %v688 = vrcp.pop %v686
  %v689 = vmul.f32 1.0, %v688
  %v690 = vrcp.pop %v687
  %v691 = vmul.f32 1.0, %v690
  %v692 = vtanh.pop %v678
  %v693 = vmul.f32 %v689, %v596
  %695 = vrot.lane.b32.xlu0 %v692, 64
  %v696 = vpop.permute.xlu0 %695
  %v698 = vmul.f32 %v689, %v696
  %700 = vrot.lane.b32.xlu0 %v698, 64
  %v701 = vpop.permute.xlu0 %700
  %v703 = vadd.f32 %v693, %v701
  %v704 = vtanh.pop %v703
  %706 = vrot.lane.b32.xlu0 %v704, 64
  %v707 = vpop.permute.xlu0 %706
  %v709 = vmul.f32 %v691, %v707
  %s710 = scalar_lea.vmem %s1, 96
  %v711 = vld [vmem:[%s710] sm:$0xff]
  %v712 = vld [vmem:[%s710 + $0x8] sm:$0xff]
  %v714 = vsel %vm66, %v709, 0
  %716 = vmatprep.subr.mxu0 0.0
  %717 = vmatpush1.msra.mxu0 0.0
  %718 = vmatprep.subr.mxu0 0.0
  %719 = vmatpush1.msra.mxu0 0.0
  %720 = vmatprep.subr.mxu0 0.0
  %721 = vmatpush1.msra.mxu0 0.0
  %722 = vmatprep.subr.mxu0 0.0
  %723 = vmatpush1.msra.mxu0 0.0
  %724 = vmatprep.subr.mxu0 0.0
  %725 = vmatpush1.msra.mxu0 0.0
  %726 = vmatprep.subr.mxu0 0.0
  %727 = vmatpush1.msra.mxu0 0.0
  %728 = vmatprep.subr.mxu0 0.0
  %729 = vmatpush1.msra.mxu0 0.0
  %730 = vmatprep.subr.mxu0 0.0
  %731 = vmatpush1.msra.mxu0 0.0
  %732 = vmatprep.subr.mxu0 %v37
  %733 = vmatpush1.msra.mxu0 %v36
  %734 = vmatprep.subr.mxu0 %v35
  %735 = vmatpush1.msra.mxu0 %v34
  %736 = vmatprep.subr.mxu0 %v33
  %737 = vmatpush1.msra.mxu0 %v32
  %738 = vmatprep.subr.mxu0 %v31
  %739 = vmatpush1.msra.mxu0 %v30
  %740 = vmatprep.subr.mxu0 %v29
  %741 = vmatpush1.msra.mxu0 %v28
  %742 = vmatprep.subr.mxu0 %v27
  %743 = vmatpush1.msra.mxu0 %v26
  %744 = vmatprep.subr.mxu0 %v25
  %745 = vmatpush1.msra.mxu0 %v24
  %746 = vmatprep.subr.mxu0 %v23
  %747 = vmatpush1.msra.mxu0 %v22
  %748 = vmatprep.subr.mxu0 0.0
  %749 = vmatpush2.msra.mxu0 0.0
  %750 = vmatprep.subr.mxu0 0.0
  %751 = vmatpush2.msra.mxu0 0.0
  %752 = vmatprep.subr.mxu0 0.0
  %753 = vmatpush2.msra.mxu0 0.0
  %754 = vmatprep.subr.mxu0 0.0
  %755 = vmatpush2.msra.mxu0 0.0
  %756 = vmatprep.subr.mxu0 0.0
  %757 = vmatpush2.msra.mxu0 0.0
  %758 = vmatprep.subr.mxu0 0.0
  %759 = vmatpush2.msra.mxu0 0.0
  %760 = vmatprep.subr.mxu0 0.0
  %761 = vmatpush2.msra.mxu0 0.0
  %762 = vmatprep.subr.mxu0 0.0
  %763 = vmatpush2.msra.mxu0 0.0
  %764 = vmatprep.subr.mxu0 0.0
  %765 = vmatpush2.msra.mxu0 0.0
  %766 = vmatprep.subr.mxu0 0.0
  %767 = vmatpush2.msra.mxu0 0.0
  %768 = vmatprep.subr.mxu0 0.0
  %769 = vmatpush2.msra.mxu0 0.0
  %770 = vmatprep.subr.mxu0 0.0
  %771 = vmatpush2.msra.mxu0 0.0
  %772 = vmatprep.subr.mxu0 0.0
  %773 = vmatpush2.msra.mxu0 0.0
  %774 = vmatprep.subr.mxu0 0.0
  %775 = vmatpush2.msra.mxu0 0.0
  %776 = vmatprep.subr.mxu0 0.0
  %777 = vmatpush2.msra.mxu0 0.0
  %778 = vmatprep.subr.mxu0 0.0
  %779 = vmatpush2.msra.mxu0 0.0
  %780 = vmatprep.mubr.f32.mxu0 0.0
  %781 = vmatmul.mubr.f32.gmra.mxu0 %v714
  %v782 = vpop.f32.mrf.mxu0
  %v783 = vadd.f32 %v711, %v782
  %v784 = vpop.f32.mrf.mxu0
  %v785 = vadd.f32 %v712, %v784
  %786 = vdwg.mxu0
  %v787 = vxor.u32 %v783, 2147483648
  %v788 = vxor.u32 %v785, 2147483648
  %v789 = vmul.f32 %v787, 1.442695
  %v790 = vpow.pop %v789
  %v791 = vmul.f32 %v788, 1.442695
  %v792 = vpow.pop %v791
  %v793 = vadd.f32 %v790, 1.0
  %v794 = vadd.f32 %v792, 1.0
  %v795 = vrcp.pop %v793
  %v796 = vmul.f32 1.0, %v795
  %v797 = vrcp.pop %v794
  %v798 = vmul.f32 1.0, %v797
  %v799 = vtanh.pop %v785
  %v800 = vmul.f32 %v796, %v703
  %802 = vrot.lane.b32.xlu0 %v799, 64
  %v803 = vpop.permute.xlu0 %802
  %v805 = vmul.f32 %v796, %v803
  %807 = vrot.lane.b32.xlu0 %v805, 64
  %v808 = vpop.permute.xlu0 %807
  %v810 = vadd.f32 %v800, %v808
  %v811 = vtanh.pop %v810
  %813 = vrot.lane.b32.xlu0 %v811, 64
  %v814 = vpop.permute.xlu0 %813
  %v816 = vmul.f32 %v798, %v814
  %s817 = scalar_lea.vmem %s1, 112
  %v818 = vld [vmem:[%s817] sm:$0xff]
  %v819 = vld [vmem:[%s817 + $0x8] sm:$0xff]
  %v821 = vsel %vm66, %v816, 0
  %823 = vmatprep.subr.mxu0 0.0
  %824 = vmatpush1.msra.mxu0 0.0
  %825 = vmatprep.subr.mxu0 0.0
  %826 = vmatpush1.msra.mxu0 0.0
  %827 = vmatprep.subr.mxu0 0.0
  %828 = vmatpush1.msra.mxu0 0.0
  %829 = vmatprep.subr.mxu0 0.0
  %830 = vmatpush1.msra.mxu0 0.0
  %831 = vmatprep.subr.mxu0 0.0
  %832 = vmatpush1.msra.mxu0 0.0
  %833 = vmatprep.subr.mxu0 0.0
  %834 = vmatpush1.msra.mxu0 0.0
  %835 = vmatprep.subr.mxu0 0.0
  %836 = vmatpush1.msra.mxu0 0.0
  %837 = vmatprep.subr.mxu0 0.0
  %838 = vmatpush1.msra.mxu0 0.0
  %839 = vmatprep.subr.mxu0 %v37
  %840 = vmatpush1.msra.mxu0 %v36
  %841 = vmatprep.subr.mxu0 %v35
  %842 = vmatpush1.msra.mxu0 %v34
  %843 = vmatprep.subr.mxu0 %v33
  %844 = vmatpush1.msra.mxu0 %v32
  %845 = vmatprep.subr.mxu0 %v31
  %846 = vmatpush1.msra.mxu0 %v30
  %847 = vmatprep.subr.mxu0 %v29
  %848 = vmatpush1.msra.mxu0 %v28
  %849 = vmatprep.subr.mxu0 %v27
  %850 = vmatpush1.msra.mxu0 %v26
  %851 = vmatprep.subr.mxu0 %v25
  %852 = vmatpush1.msra.mxu0 %v24
  %853 = vmatprep.subr.mxu0 %v23
  %854 = vmatpush1.msra.mxu0 %v22
  %855 = vmatprep.subr.mxu0 0.0
  %856 = vmatpush2.msra.mxu0 0.0
  %857 = vmatprep.subr.mxu0 0.0
  %858 = vmatpush2.msra.mxu0 0.0
  %859 = vmatprep.subr.mxu0 0.0
  %860 = vmatpush2.msra.mxu0 0.0
  %861 = vmatprep.subr.mxu0 0.0
  %862 = vmatpush2.msra.mxu0 0.0
  %863 = vmatprep.subr.mxu0 0.0
  %864 = vmatpush2.msra.mxu0 0.0
  %865 = vmatprep.subr.mxu0 0.0
  %866 = vmatpush2.msra.mxu0 0.0
  %867 = vmatprep.subr.mxu0 0.0
  %868 = vmatpush2.msra.mxu0 0.0
  %869 = vmatprep.subr.mxu0 0.0
  %870 = vmatpush2.msra.mxu0 0.0
  %871 = vmatprep.subr.mxu0 0.0
  %872 = vmatpush2.msra.mxu0 0.0
  %873 = vmatprep.subr.mxu0 0.0
  %874 = vmatpush2.msra.mxu0 0.0
  %875 = vmatprep.subr.mxu0 0.0
  %876 = vmatpush2.msra.mxu0 0.0
  %877 = vmatprep.subr.mxu0 0.0
  %878 = vmatpush2.msra.mxu0 0.0
  %879 = vmatprep.subr.mxu0 0.0
  %880 = vmatpush2.msra.mxu0 0.0
  %881 = vmatprep.subr.mxu0 0.0
  %882 = vmatpush2.msra.mxu0 0.0
  %883 = vmatprep.subr.mxu0 0.0
  %884 = vmatpush2.msra.mxu0 0.0
  %885 = vmatprep.subr.mxu0 0.0
  %886 = vmatpush2.msra.mxu0 0.0
  %887 = vmatprep.mubr.f32.mxu0 0.0
  %888 = vmatmul.mubr.f32.gmra.mxu0 %v821
  %v889 = vpop.f32.mrf.mxu0
  %v890 = vadd.f32 %v818, %v889
  %v891 = vpop.f32.mrf.mxu0
  %v892 = vadd.f32 %v819, %v891
  %893 = vdwg.mxu0
  %v894 = vxor.u32 %v890, 2147483648
  %v895 = vxor.u32 %v892, 2147483648
  %v896 = vmul.f32 %v894, 1.442695
  %v897 = vpow.pop %v896
  %v898 = vmul.f32 %v895, 1.442695
  %v899 = vpow.pop %v898
  %v900 = vadd.f32 %v897, 1.0
  %v901 = vadd.f32 %v899, 1.0
  %v902 = vrcp.pop %v900
  %v903 = vmul.f32 1.0, %v902
  %v904 = vrcp.pop %v901
  %v905 = vmul.f32 1.0, %v904
  %v906 = vtanh.pop %v892
  %v907 = vmul.f32 %v903, %v810
  %909 = vrot.lane.b32.xlu0 %v906, 64
  %v910 = vpop.permute.xlu0 %909
  %v912 = vmul.f32 %v903, %v910
  %914 = vrot.lane.b32.xlu0 %v912, 64
  %v915 = vpop.permute.xlu0 %914
  %v917 = vadd.f32 %v907, %v915
  %v918 = vtanh.pop %v917
  %920 = vrot.lane.b32.xlu0 %v918, 64
  %v921 = vpop.permute.xlu0 %920
  %v923 = vmul.f32 %v905, %v921
  %v924 = vld [vmem:[%s3] sm:$0xff]
  %v925 = vld [vmem:[%s3 + $0x8] sm:$0xff]
  %v926 = vld [vmem:[%s3 + $0x10] sm:$0xff]
  %v927 = vld [vmem:[%s3 + $0x18] sm:$0xff]
  %v928 = vld [vmem:[%s4] sm:$0x1]
  %v930 = vlaneseq
  %v931 = vshrl.u32 %v930, 7
  %v932 = vsub.s32 0, %v931
  %v933 = vrot.slane %v928, %v932
  %936 = vrot.lane.b32.xlu0 %v923, 96
  %v937 = vpop.permute.xlu0 %936
  %v938 = vsel %vm61, %v937, 0
  %940 = vmatprep.subr.mxu0 0.0
  %941 = vmatpush1.msra.mxu0 0.0
  %942 = vmatprep.subr.mxu0 0.0
  %943 = vmatpush1.msra.mxu0 0.0
  %944 = vmatprep.subr.mxu0 0.0
  %945 = vmatpush1.msra.mxu0 0.0
  %946 = vmatprep.subr.mxu0 0.0
  %947 = vmatpush1.msra.mxu0 0.0
  %948 = vmatprep.subr.mxu0 0.0
  %949 = vmatpush1.msra.mxu0 0.0
  %950 = vmatprep.subr.mxu0 0.0
  %951 = vmatpush1.msra.mxu0 0.0
  %952 = vmatprep.subr.mxu0 0.0
  %953 = vmatpush1.msra.mxu0 0.0
  %954 = vmatprep.subr.mxu0 0.0
  %955 = vmatpush1.msra.mxu0 0.0
  %956 = vmatprep.subr.mxu0 0.0
  %957 = vmatpush1.msra.mxu0 0.0
  %958 = vmatprep.subr.mxu0 0.0
  %959 = vmatpush1.msra.mxu0 0.0
  %960 = vmatprep.subr.mxu0 0.0
  %961 = vmatpush1.msra.mxu0 0.0
  %962 = vmatprep.subr.mxu0 0.0
  %963 = vmatpush1.msra.mxu0 0.0
  %964 = vmatprep.subr.mxu0 0.0
  %965 = vmatpush1.msra.mxu0 %v927
  %966 = vmatprep.subr.mxu0 0.0
  %967 = vmatpush1.msra.mxu0 %v926
  %968 = vmatprep.subr.mxu0 0.0
  %969 = vmatpush1.msra.mxu0 %v925
  %970 = vmatprep.subr.mxu0 0.0
  %971 = vmatpush1.msra.mxu0 %v924
  %972 = vmatprep.subr.mxu0 0.0
  %973 = vmatpush2.msra.mxu0 0.0
  %974 = vmatprep.subr.mxu0 0.0
  %975 = vmatpush2.msra.mxu0 0.0
  %976 = vmatprep.subr.mxu0 0.0
  %977 = vmatpush2.msra.mxu0 0.0
  %978 = vmatprep.subr.mxu0 0.0
  %979 = vmatpush2.msra.mxu0 0.0
  %980 = vmatprep.subr.mxu0 0.0
  %981 = vmatpush2.msra.mxu0 0.0
  %982 = vmatprep.subr.mxu0 0.0
  %983 = vmatpush2.msra.mxu0 0.0
  %984 = vmatprep.subr.mxu0 0.0
  %985 = vmatpush2.msra.mxu0 0.0
  %986 = vmatprep.subr.mxu0 0.0
  %987 = vmatpush2.msra.mxu0 0.0
  %988 = vmatprep.subr.mxu0 0.0
  %989 = vmatpush2.msra.mxu0 0.0
  %990 = vmatprep.subr.mxu0 0.0
  %991 = vmatpush2.msra.mxu0 0.0
  %992 = vmatprep.subr.mxu0 0.0
  %993 = vmatpush2.msra.mxu0 0.0
  %994 = vmatprep.subr.mxu0 0.0
  %995 = vmatpush2.msra.mxu0 0.0
  %996 = vmatprep.subr.mxu0 0.0
  %997 = vmatpush2.msra.mxu0 0.0
  %998 = vmatprep.subr.mxu0 0.0
  %999 = vmatpush2.msra.mxu0 0.0
  %1000 = vmatprep.subr.mxu0 0.0
  %1001 = vmatpush2.msra.mxu0 0.0
  %1002 = vmatprep.subr.mxu0 0.0
  %1003 = vmatpush2.msra.mxu0 0.0
  %1004 = vmatprep.mubr.f32.mxu0 0.0
  %1005 = vmatmul.mubr.f32.gmra.mxu0 %v938
  %v1006 = vpop.f32.mrf.mxu0
  %v1007 = vadd.f32 %v933, %v1006
  %v1008 = vpop.f32.mrf.mxu0
  %1009 = vdwg.mxu0
  %1010 = vst [vmem:[%s5] sm:$0xff] %v1007
  %v1011 = vsel %vm61, %v816, %v923
  %v1012 = vsel %vm66, %v1011, %v810
  %vm1013 = vcmask 785408
  %v1014 = vsel %vm1013, %v1012, %v917
  %1015 = vst [vmem:[%s6] sm:$0xff] %v1014
  // Predicated region
  $region22: #{rnn_classifier_forward.1} parent=0 // pred_check
    _
  $region23: #{rnn_classifier_forward.1} parent=0 // pred_check_branch
    %1017 = sbr.rel (0) target = $region25
  $region24: #{rnn_classifier_forward.1} parent=0 // pred_region
    _
  $region25: #{rnn_classifier_forward.1} parent=0 // pred_fallthru
    _
  // Predicated region
  $region26: #{rnn_classifier_forward.1} parent=0 // pred_check
    _
  $region27: #{rnn_classifier_forward.1} parent=0 // pred_check_branch
    %1019 = sbr.rel (0) target = $region29
  $region28: #{rnn_classifier_forward.1} parent=0 // pred_region
    _
  $region29: #{rnn_classifier_forward.1} parent=0 // pred_fallthru
    _
  // Predicated region
  $region30: #{rnn_classifier_forward.1} parent=0 // pred_check
    _
  $region31: #{rnn_classifier_forward.1} parent=0 // pred_check_branch
    %1021 = sbr.rel (0) target = $region33
  $region32: #{rnn_classifier_forward.1} parent=0 // pred_region
    _
  $region33: #{rnn_classifier_forward.1} parent=0 // pred_fallthru
    _
  // Predicated region
  $region34: #{rnn_classifier_forward.1} parent=0 // pred_check
    _
  $region35: #{rnn_classifier_forward.1} parent=0 // pred_check_branch
    %1023 = sbr.rel (0) target = $region37
  $region36: #{rnn_classifier_forward.1} parent=0 // pred_region
    _
  $region37: #{rnn_classifier_forward.1} parent=0 // pred_fallthru
    _

</llo_original>
